<compile_context>
chip_gen: v5e
topology: v5e:2x2
jax: 0.10.0
libtpu: 0.0.40
codegen_flags: <defaults>
</compile_context>

<pallas_src>
import math
import functools

import jax
import jax.numpy as jnp
from jax.experimental import pallas as pl
from jax.experimental.pallas import tpu as pltpu


# ----------------------------------------------------------------------------
# Kernel: one grid step = one (batch block, layer). Layer axis carries x in VMEM.
# ----------------------------------------------------------------------------
def sketch_layer_kernel(x_ref, wqkv_ref, bqkv_ref, wo_ref, bo_ref,
                        w1_ref, b1_ref, w2_ref, b2_ref, wd_ref, bd_ref,
                        rw_ref, out_ref, x_acc, *, nhead, seq_len):
  """One ReZero encoder layer on one batch block; decoder on the last layer step.

  x_ref:    (R, D)   f32   input activations for this batch block (R = TB*S)
  wqkv_ref: (D, 3D)  bf16  this layer's fused Q|K|V weight (Q pre-scaled by 1/sqrt(dh))
  bqkv_ref: (1, 3D)  f32   fused bias (bq pre-scaled)
  wo_ref:   (D, D)   bf16  attention output projection;  bo_ref: (1, D) f32
  w1_ref:   (D, F)   bf16  FFN linear1;  b1_ref: (1, F) f32
  w2_ref:   (F, D)   bf16  FFN linear2;  b2_ref: (1, D) f32
  wd_ref:   (D, Tp)  bf16  decoder weight (lane-padded);  bd_ref: (1, Tp) f32
  rw_ref:   (L,)     f32   ReZero scalars (SMEM)
  out_ref:  (R, Tp)  f32   lane-dense logits for this batch block
  x_acc:    (R, D)   f32   VMEM scratch carrying activations across layer steps
  """
  l = pl.program_id(1)
  last = pl.num_programs(1) - 1

  R, D = x_acc.shape
  S = seq_len
  tb = R // S
  dh = D // nhead

  @pl.when(l == 0)
  def _():
    x_acc[...] = x_ref[...]

  x = x_acc[...]                               # (R, D) f32
  rw = rw_ref[l]                               # ReZero scalar from SMEM

  # Additive causal mask, finite negative (same semantics as the -inf torch mask for
  # causal rows, but robust / no inf arithmetic).
  row = jax.lax.broadcasted_iota(jnp.int32, (S, S), 0)
  col = jax.lax.broadcasted_iota(jnp.int32, (S, S), 1)
  neg = float(jnp.finfo(jnp.float32).min) * 0.5
  mask = jnp.where(col <= row, 0.0, neg).astype(jnp.float32)[None]   # (1, S, S)

  # ---- fused Q/K/V projection: one (R, D) @ (D, 3D) GEMM ----
  qkv = jnp.dot(x.astype(jnp.bfloat16), wqkv_ref[...],
                preferred_element_type=jnp.float32) + bqkv_ref[...]  # (R, 3D) f32
  qkv_bf = qkv.astype(jnp.bfloat16)

  # ---- per-head attention: lane slices of qkv, no concats / batch folds ----
  attn = None
  for h in range(nhead):                       # static unroll (nhead small)
    qh = qkv_bf[:, 0 * D + h * dh: 0 * D + (h + 1) * dh].reshape(tb, S, dh)
    kh = qkv_bf[:, 1 * D + h * dh: 1 * D + (h + 1) * dh].reshape(tb, S, dh)
    vh = qkv_bf[:, 2 * D + h * dh: 2 * D + (h + 1) * dh].reshape(tb, S, dh)

    s = jnp.einsum('bqd,bkd->bqk', qh, kh,
                   preferred_element_type=jnp.float32)               # (tb, S, S)
    s = s + mask
    s = s - jnp.max(s, axis=-1, keepdims=True)
    p = jnp.exp(s)
    p = p * pl.reciprocal(jnp.sum(p, axis=-1, keepdims=True), approx=True)
    oh = jnp.einsum('bqk,bkd->bqd', p.astype(jnp.bfloat16), vh,
                    preferred_element_type=jnp.float32)              # (tb, S, dh)

    # Accumulate this head's slice of the output projection directly (avoids head_cat).
    contrib = jnp.dot(oh.reshape(R, dh).astype(jnp.bfloat16),
                      wo_ref[h * dh:(h + 1) * dh, :],
                      preferred_element_type=jnp.float32)            # (R, D)
    attn = contrib if attn is None else attn + contrib
  attn = attn + bo_ref[...]

  x = x + rw * attn                            # ReZero residual #1 (dropout identity)

  # ---- feed-forward ----
  h1 = jnp.dot(x.astype(jnp.bfloat16), w1_ref[...],
               preferred_element_type=jnp.float32) + b1_ref[...]
  h1 = jnp.maximum(h1, 0.0)
  ff = jnp.dot(h1.astype(jnp.bfloat16), w2_ref[...],
               preferred_element_type=jnp.float32) + b2_ref[...]

  x = x + rw * ff                              # ReZero residual #2
  x_acc[...] = x

  # ---- decoder on the last layer step: lane-dense (R, Tpad) store ----
  @pl.when(l == last)
  def _():
    out_ref[...] = jnp.dot(x.astype(jnp.bfloat16), wd_ref[...],
                           preferred_element_type=jnp.float32) + bd_ref[...]


# ----------------------------------------------------------------------------
# Wrapper: pack weights, build grid/BlockSpecs, issue a single pallas_call
# ----------------------------------------------------------------------------
def _pack_layer_weights(params, *, nhead):
  layers = params['layers']
  D = params['decoder_w'].shape[0]
  dh = D // nhead
  scale = 1.0 / math.sqrt(dh)

  def stack(name):
    return jnp.stack([lp[name] for lp in layers], axis=0)

  wqkv = jnp.concatenate([stack('wq') * scale, stack('wk'), stack('wv')],
                         axis=-1).astype(jnp.bfloat16)          # (L, D, 3D)
  bqkv = jnp.concatenate([stack('bq') * scale, stack('bk'), stack('bv')],
                         axis=-1)                               # (L, 1, 3D) f32
  return dict(
      wqkv=wqkv, bqkv=bqkv,
      wo=stack('wo').astype(jnp.bfloat16), bo=stack('bo'),
      w1=stack('w1').astype(jnp.bfloat16), b1=stack('b1'),
      w2=stack('w2').astype(jnp.bfloat16), b2=stack('b2'),
      rw=jnp.concatenate([lp['rw'] for lp in layers]),          # (L,)
  )


def _nbytes(shape, dtype):
  n = 1
  for d in shape:
    n *= int(d)
  return n * jnp.dtype(dtype).itemsize


def fused_sketch_forward(x2d, params, *, nhead, seq_len, batch_block=1):
  """x2d: (B*S, D) f32 batch-major activations -> logits (B*S, ntoken) f32."""
  BS, D = x2d.shape
  S = seq_len
  B = BS // S
  pk = _pack_layer_weights(params, nhead=nhead)
  L = pk['wqkv'].shape[0]
  F = pk['w1'].shape[2]

  # Legal batch block: rows-per-block must satisfy the (8,·) sublane rule.
  if B % batch_block != 0 or (batch_block * S) % 8 != 0:
    batch_block = B                         # full-dim block is always legal
  R = batch_block * S

  ntoken = params['decoder_w'].shape[1]
  tpad = max(128, ((ntoken + 127) // 128) * 128)     # lane-dense decoder output
  wd = jnp.pad(params['decoder_w'], ((0, 0), (0, tpad - ntoken))).astype(jnp.bfloat16)
  bd = jnp.pad(params['decoder_b'], ((0, 0), (0, tpad - ntoken)))

  # Explicit VMEM budget: double-buffered per-step blocks + resident arrays + slack.
  blocked = (_nbytes((R, D), jnp.float32) +
             _nbytes((D, 3 * D), jnp.bfloat16) + _nbytes((1, 3 * D), jnp.float32) +
             _nbytes((D, D), jnp.bfloat16) + _nbytes((1, D), jnp.float32) +
             _nbytes((D, F), jnp.bfloat16) + _nbytes((1, F), jnp.float32) +
             _nbytes((F, D), jnp.bfloat16) + _nbytes((1, D), jnp.float32) +
             _nbytes((R, tpad), jnp.float32))
  resident = (_nbytes((D, tpad), jnp.bfloat16) + _nbytes((1, tpad), jnp.float32) +
              _nbytes((R, D), jnp.float32))
  vmem_limit = 2 * blocked + resident + (4 << 20)
  vmem_limit = int(min(max(vmem_limit, 8 << 20), 64 << 20))

  grid = (B // batch_block, L)

  in_specs = [
      pl.BlockSpec((R, D), lambda b, l: (b, 0)),                 # x (per batch block)
      pl.BlockSpec((None, D, 3 * D), lambda b, l: (l, 0, 0)),    # wqkv (streamed per layer)
      pl.BlockSpec((None, 1, 3 * D), lambda b, l: (l, 0, 0)),    # bqkv
      pl.BlockSpec((None, D, D), lambda b, l: (l, 0, 0)),        # wo
      pl.BlockSpec((None, 1, D), lambda b, l: (l, 0, 0)),        # bo
      pl.BlockSpec((None, D, F), lambda b, l: (l, 0, 0)),        # w1
      pl.BlockSpec((None, 1, F), lambda b, l: (l, 0, 0)),        # b1
      pl.BlockSpec((None, F, D), lambda b, l: (l, 0, 0)),        # w2
      pl.BlockSpec((None, 1, D), lambda b, l: (l, 0, 0)),        # b2
      pl.BlockSpec(memory_space=pltpu.MemorySpace.VMEM),         # wd (resident)
      pl.BlockSpec(memory_space=pltpu.MemorySpace.VMEM),         # bd (resident)
      pl.BlockSpec(memory_space=pltpu.MemorySpace.SMEM),         # rw (scalars)
  ]
  out_specs = pl.BlockSpec((R, tpad), lambda b, l: (b, 0))

  out = pl.pallas_call(
      functools.partial(sketch_layer_kernel, nhead=nhead, seq_len=S),
      out_shape=jax.ShapeDtypeStruct((B * S, tpad), jnp.float32),
      grid_spec=pltpu.PrefetchScalarGridSpec(
          num_scalar_prefetch=0, grid=grid,
          in_specs=in_specs, out_specs=out_specs,
          scratch_shapes=[pltpu.VMEM((R, D), jnp.float32)]),
      compiler_params=pltpu.CompilerParams(
          dimension_semantics=("parallel", "arbitrary"),
          vmem_limit_bytes=vmem_limit),
  )(x2d, pk['wqkv'], pk['bqkv'], pk['wo'], pk['bo'],
    pk['w1'], pk['b1'], pk['w2'], pk['b2'], wd, bd, pk['rw'])

  return out[:, :ntoken]


def sketch_model_forward(params, src, *, nhead):
  """src: (S, B, 3) int32 tokens -> logits (S, B, ntoken) float32 (torch layout)."""
  S, B, _ = src.shape
  D = params['decoder_w'].shape[0]
  ntoken = params['decoder_w'].shape[1]

  # Transpose the tiny int token indices (not the float activations) so the embedding
  # gathers come out batch-major directly: no (S,B,D)->(B,S,D) activation transpose.
  v_tok = jnp.transpose(src[1:, :, 0])          # (B, S-1)
  p_tok = jnp.transpose(src[1:, :, 1])          # (B, S-1)
  c_tok = jnp.transpose(src[:1, :, 2])          # (B, 1)

  v = jnp.take(params['value_embed'], v_tok, axis=0)            # (B, S-1, D)
  p = jnp.take(params['pos_embed'],   p_tok, axis=0)            # (B, S-1, D)
  c = jnp.take(params['class_embed'], c_tok, axis=0)            # (B, 1,   D)
  x = jnp.concatenate([c, v + p], axis=1)                       # (B, S, D)

  logits = fused_sketch_forward(x.reshape(B * S, D), params,
                                nhead=nhead, seq_len=S)         # (B*S, ntoken)
  # Only the small logits are transposed back to the torch (S, B, ntoken) layout.
  return jnp.transpose(logits.reshape(B, S, ntoken), (1, 0, 2))


# ----------------------------------------------------------------------------
# Parameter init (torch-like; ReZero weight defaults to 0.0 as in the reference)
# ----------------------------------------------------------------------------
def _uniform(key, shape, lo, hi):
  return jax.random.uniform(key, shape, jnp.float32, lo, hi)


def init_params(key, *, ntoken, ninp, nhead, nhid, nlayers, nclass,
                rezero_init=0.0):
  initrange = 0.1
  ks = iter(jax.random.split(key, 4 + nlayers * 8))
  params = {
      'value_embed': _uniform(next(ks), (ntoken + 1, ninp), -initrange, initrange),
      'pos_embed':   _uniform(next(ks), (256, ninp), -initrange, initrange),
      'class_embed': jax.random.normal(next(ks), (nclass, ninp), jnp.float32),
      # decoder stored pre-transposed (ninp, ntoken); bias zero (torch init)
      'decoder_w': _uniform(next(ks), (ninp, ntoken), -initrange, initrange),
      'decoder_b': jnp.zeros((1, ntoken), jnp.float32),
      'layers': [],
  }
  xav = math.sqrt(6.0 / (ninp + 3 * ninp))       # xavier_uniform on (3D, D) in_proj
  s1 = 1.0 / math.sqrt(ninp)
  s2 = 1.0 / math.sqrt(nhid)
  for _ in range(nlayers):
    lp = {
        'wq': _uniform(next(ks), (ninp, ninp), -xav, xav),
        'wk': _uniform(next(ks), (ninp, ninp), -xav, xav),
        'wv': _uniform(next(ks), (ninp, ninp), -xav, xav),
        'bq': jnp.zeros((1, ninp), jnp.float32),
        'bk': jnp.zeros((1, ninp), jnp.float32),
        'bv': jnp.zeros((1, ninp), jnp.float32),
        'wo': _uniform(next(ks), (ninp, ninp), -s1, s1),
        'bo': jnp.zeros((1, ninp), jnp.float32),
        'w1': _uniform(next(ks), (ninp, nhid), -s1, s1),
        'b1': _uniform(next(ks), (1, nhid), -s1, s1),
        'w2': _uniform(next(ks), (nhid, ninp), -s2, s2),
        'b2': _uniform(next(ks), (1, ninp), -s2, s2),
        'rw': jnp.full((1,), rezero_init, jnp.float32),   # ReZero weight (torch: 0.0)
    }
    params['layers'].append(lp)
  return params


# ----------------------------------------------------------------------------
if __name__ == "__main__":
  ntoken, ninp, nhead, nhid, nlayers, nclass = 48, 32, 2, 64, 2, 10
  S, B = 8, 2

  key = jax.random.PRNGKey(0)
  kv, kp, kc, kw = jax.random.split(key, 4)
  v_tok = jax.random.randint(kv, (S, B), 0, ntoken + 1, dtype=jnp.int32)
  p_tok = jax.random.randint(kp, (S, B), 0, 256, dtype=jnp.int32)
  c_tok = jax.random.randint(kc, (S, B), 0, nclass, dtype=jnp.int32)
  src = jnp.stack([v_tok, p_tok, c_tok], axis=-1)      # (S, B, 3) int32

  # rezero_init defaults to 0.0 (faithful to ReZero, where each layer starts as the
  # identity); use 0.1 so the attention / FFN path actually contributes in the demo.
  params = init_params(kw, ntoken=ntoken, ninp=ninp, nhead=nhead,
                       nhid=nhid, nlayers=nlayers, nclass=nclass,
                       rezero_init=0.1)

  fwd = jax.jit(functools.partial(sketch_model_forward, nhead=nhead))
  out = jax.block_until_ready(fwd(params, src))
  assert out.shape == (S, B, ntoken) and out.dtype == jnp.float32
  assert bool(jnp.all(jnp.isfinite(out)))
  print("KERNEL_OK")
</pallas_src>

<mosaic_0001>
module attributes {stable_mosaic.version = 11 : i64} {
  func.func @sketch_layer_kernel(%arg0: i32, %arg1: i32, %arg2: memref<8x32xf32, #tpu.memory_space<vmem>>, %arg3: memref<1x32x96xbf16, #tpu.memory_space<vmem>>, %arg4: memref<1x1x96xf32, #tpu.memory_space<vmem>>, %arg5: memref<1x32x32xbf16, #tpu.memory_space<vmem>>, %arg6: memref<1x1x32xf32, #tpu.memory_space<vmem>>, %arg7: memref<1x32x64xbf16, #tpu.memory_space<vmem>>, %arg8: memref<1x1x64xf32, #tpu.memory_space<vmem>>, %arg9: memref<1x64x32xbf16, #tpu.memory_space<vmem>>, %arg10: memref<1x1x32xf32, #tpu.memory_space<vmem>>, %arg11: memref<32x128xbf16, #tpu.memory_space<vmem>>, %arg12: memref<1x128xf32, #tpu.memory_space<vmem>>, %arg13: memref<2xf32, #tpu.memory_space<smem>>, %arg14: memref<8x128xf32, #tpu.memory_space<vmem>>, %arg15: memref<8x32xf32, #tpu.memory_space<vmem>>) attributes {dimension_semantics = [#tpu.dimension_semantics<parallel>, #tpu.dimension_semantics<arbitrary>], iteration_bounds = array<i64: 2, 2>, scalar_prefetch = 0 : i64, scratch_operands = 1 : i64, tpu.core_type = #tpu.core_type<tc>, window_params = [{transform_indices = @transform_0, window_bounds = array<i64: 8, 32>}, {transform_indices = @transform_1, window_bounds = array<i64: 1, 32, 96>}, {transform_indices = @transform_2, window_bounds = array<i64: 1, 1, 96>}, {transform_indices = @transform_3, window_bounds = array<i64: 1, 32, 32>}, {transform_indices = @transform_4, window_bounds = array<i64: 1, 1, 32>}, {transform_indices = @transform_5, window_bounds = array<i64: 1, 32, 64>}, {transform_indices = @transform_6, window_bounds = array<i64: 1, 1, 64>}, {transform_indices = @transform_7, window_bounds = array<i64: 1, 64, 32>}, {transform_indices = @transform_8, window_bounds = array<i64: 1, 1, 32>}, {pipeline_mode = #tpu.pipeline_mode<synchronous>, transform_indices = @transform_9, window_bounds = array<i64: 32, 128>}, {pipeline_mode = #tpu.pipeline_mode<synchronous>, transform_indices = @transform_10, window_bounds = array<i64: 1, 128>}, {transform_indices = @transform_11, window_bounds = array<i64: 2>}, {transform_indices = @transform_12, window_bounds = array<i64: 8, 128>}]} {
    %c0_i32 = arith.constant 0 : i32
    %0 = arith.cmpi eq, %arg1, %c0_i32 : i32
    %1 = arith.extui %0 : i1 to i32
    %c0_i32_0 = arith.constant 0 : i32
    %2 = arith.cmpi ne, %1, %c0_i32_0 : i32
    scf.if %2 {
      %c0_46 = arith.constant 0 : index
      %c0_47 = arith.constant 0 : index
      %105 = vector.load %arg2[%c0_46, %c0_47] : memref<8x32xf32, #tpu.memory_space<vmem>>, vector<8x32xf32>
      %c0_48 = arith.constant 0 : index
      %c0_49 = arith.constant 0 : index
      %106 = vector.load %arg15[%c0_48, %c0_49] : memref<8x32xf32, #tpu.memory_space<vmem>>, vector<8x32xf32>
      tpu.vector_store %arg15[%c0_48, %c0_49], %105 {strides = array<i32>} : memref<8x32xf32, #tpu.memory_space<vmem>>, vector<8x32xf32>,
    } else {
    }
    %c0 = arith.constant 0 : index
    %c0_1 = arith.constant 0 : index
    %3 = vector.load %arg15[%c0, %c0_1] : memref<8x32xf32, #tpu.memory_space<vmem>>, vector<8x32xf32>
    %4 = arith.index_cast %arg1 : i32 to index
    %5 = memref.load %arg13[%4] : memref<2xf32, #tpu.memory_space<smem>>
    %6 = tpu.iota {dimensions = array<i32: 0>} : vector<8x8xi32>
    %7 = tpu.iota {dimensions = array<i32: 1>} : vector<8x8xi32>
    %8 = arith.cmpi sle, %7, %6 : vector<8x8xi32>
    %cst = arith.constant 0.000000e+00 : f32
    %cst_2 = arith.constant -1.70141173E+38 : f32
    %9 = vector.broadcast %cst : f32 to vector<8x8xf32>
    %10 = vector.broadcast %cst_2 : f32 to vector<8x8xf32>
    %11 = arith.select %8, %9, %10 : vector<8x8xi1>, vector<8x8xf32>
    %12 = vector.shape_cast %11 : vector<8x8xf32> to vector<1x8x8xf32>
    %13 = arith.truncf %3 : vector<8x32xf32> to vector<8x32xbf16>
    %c0_3 = arith.constant 0 : index
    %c0_4 = arith.constant 0 : index
    %c0_5 = arith.constant 0 : index
    %14 = vector.load %arg3[%c0_3, %c0_4, %c0_5] : memref<1x32x96xbf16, #tpu.memory_space<vmem>>, vector<1x32x96xbf16>
    %15 = vector.shape_cast %14 : vector<1x32x96xbf16> to vector<32x96xbf16>
    %cst_6 = arith.constant dense<0.000000e+00> : vector<8x96xf32>
    %16 = tpu.matmul %13, %15, %cst_6 {dimension_numbers = #tpu.dot_dimension_numbers<[1], [0], [0], [1], [0, 0, 1, 1], [], []>} : vector<8x32xbf16>, vector<32x96xbf16>, vector<8x96xf32> -> vector<8x96xf32>
    %c0_7 = arith.constant 0 : index
    %c0_8 = arith.constant 0 : index
    %c0_9 = arith.constant 0 : index
    %17 = vector.load %arg4[%c0_7, %c0_8, %c0_9] : memref<1x1x96xf32, #tpu.memory_space<vmem>>, vector<1x1x96xf32>
    %18 = vector.shape_cast %17 : vector<1x1x96xf32> to vector<1x96xf32>
    %19 = vector.broadcast %18 : vector<1x96xf32> to vector<8x96xf32>
    %20 = arith.addf %16, %19 : vector<8x96xf32>
    %21 = arith.truncf %20 : vector<8x96xf32> to vector<8x96xbf16>
    %22 = vector.extract_strided_slice %21 {offsets = [0, 0], sizes = [8, 16], strides = [1, 1]} : vector<8x96xbf16> to vector<8x16xbf16>
    %23 = vector.shape_cast %22 : vector<8x16xbf16> to vector<1x8x16xbf16>
    %24 = vector.extract_strided_slice %21 {offsets = [0, 32], sizes = [8, 16], strides = [1, 1]} : vector<8x96xbf16> to vector<8x16xbf16>
    %25 = vector.shape_cast %24 : vector<8x16xbf16> to vector<1x8x16xbf16>
    %26 = vector.extract_strided_slice %21 {offsets = [0, 64], sizes = [8, 16], strides = [1, 1]} : vector<8x96xbf16> to vector<8x16xbf16>
    %27 = vector.shape_cast %26 : vector<8x16xbf16> to vector<1x8x16xbf16>
    "tpu.trace_start"() <{level = 10 : i32, message = "bqd,bkd->bqk"}> : () -> ()
    %cst_10 = arith.constant dense<0.000000e+00> : vector<1x8x8xf32>
    %28 = tpu.matmul %23, %25, %cst_10 {dimension_numbers = #tpu.dot_dimension_numbers<[2], [2], [1], [1], [0, 0, 0, 1, 1, 1], [0], [0]>} : vector<1x8x16xbf16>, vector<1x8x16xbf16>, vector<1x8x8xf32> -> vector<1x8x8xf32>
    "tpu.trace_stop"() : () -> ()
    %29 = arith.addf %28, %12 : vector<1x8x8xf32>
    %cst_11 = arith.constant dense<0xFF800000> : vector<1x8xf32>
    %30 = vector.multi_reduction <maximumf>, %29, %cst_11 [2] : vector<1x8x8xf32> to vector<1x8xf32>
    %31 = vector.shape_cast %30 : vector<1x8xf32> to vector<1x8x1xf32>
    %32 = vector.broadcast %31 : vector<1x8x1xf32> to vector<1x8x8xf32>
    %33 = arith.subf %29, %32 : vector<1x8x8xf32>
    %34 = math.exp %33 : vector<1x8x8xf32>
    %cst_12 = arith.constant dense<0.000000e+00> : vector<1x8xf32>
    %35 = vector.multi_reduction <add>, %34, %cst_12 [2] : vector<1x8x8xf32> to vector<1x8xf32>
    %36 = vector.shape_cast %35 : vector<1x8xf32> to vector<1x8x1xf32>
    %37 = tpu.reciprocal %36 {approx = true} : vector<1x8x1xf32> -> vector<1x8x1xf32>
    %38 = vector.broadcast %37 : vector<1x8x1xf32> to vector<1x8x8xf32>
    %39 = arith.mulf %34, %38 : vector<1x8x8xf32>
    %40 = arith.truncf %39 : vector<1x8x8xf32> to vector<1x8x8xbf16>
    "tpu.trace_start"() <{level = 10 : i32, message = "bqk,bkd->bqd"}> : () -> ()
    %cst_13 = arith.constant dense<0.000000e+00> : vector<1x8x16xf32>
    %41 = tpu.matmul %40, %27, %cst_13 {dimension_numbers = #tpu.dot_dimension_numbers<[2], [1], [1], [2], [0, 0, 0, 1, 1, 2], [0], [0]>} : vector<1x8x8xbf16>, vector<1x8x16xbf16>, vector<1x8x16xf32> -> vector<1x8x16xf32>
    "tpu.trace_stop"() : () -> ()
    %42 = vector.shape_cast %41 : vector<1x8x16xf32> to vector<8x16xf32>
    %43 = arith.truncf %42 : vector<8x16xf32> to vector<8x16xbf16>
    %c0_14 = arith.constant 0 : index
    %c0_15 = arith.constant 0 : index
    %c0_16 = arith.constant 0 : index
    %44 = vector.load %arg5[%c0_14, %c0_15, %c0_16] : memref<1x32x32xbf16, #tpu.memory_space<vmem>>, vector<1x16x32xbf16>
    %45 = vector.shape_cast %44 : vector<1x16x32xbf16> to vector<16x32xbf16>
    %cst_17 = arith.constant dense<0.000000e+00> : vector<8x32xf32>
    %46 = tpu.matmul %43, %45, %cst_17 {dimension_numbers = #tpu.dot_dimension_numbers<[1], [0], [0], [1], [0, 0, 1, 1], [], []>} : vector<8x16xbf16>, vector<16x32xbf16>, vector<8x32xf32> -> vector<8x32xf32>
    %47 = vector.extract_strided_slice %21 {offsets = [0, 16], sizes = [8, 16], strides = [1, 1]} : vector<8x96xbf16> to vector<8x16xbf16>
    %48 = vector.shape_cast %47 : vector<8x16xbf16> to vector<1x8x16xbf16>
    %49 = vector.extract_strided_slice %21 {offsets = [0, 48], sizes = [8, 16], strides = [1, 1]} : vector<8x96xbf16> to vector<8x16xbf16>
    %50 = vector.shape_cast %49 : vector<8x16xbf16> to vector<1x8x16xbf16>
    %51 = vector.extract_strided_slice %21 {offsets = [0, 80], sizes = [8, 16], strides = [1, 1]} : vector<8x96xbf16> to vector<8x16xbf16>
    %52 = vector.shape_cast %51 : vector<8x16xbf16> to vector<1x8x16xbf16>
    "tpu.trace_start"() <{level = 10 : i32, message = "bqd,bkd->bqk"}> : () -> ()
    %cst_18 = arith.constant dense<0.000000e+00> : vector<1x8x8xf32>
    %53 = tpu.matmul %48, %50, %cst_18 {dimension_numbers = #tpu.dot_dimension_numbers<[2], [2], [1], [1], [0, 0, 0, 1, 1, 1], [0], [0]>} : vector<1x8x16xbf16>, vector<1x8x16xbf16>, vector<1x8x8xf32> -> vector<1x8x8xf32>
    "tpu.trace_stop"() : () -> ()
    %54 = arith.addf %53, %12 : vector<1x8x8xf32>
    %cst_19 = arith.constant dense<0xFF800000> : vector<1x8xf32>
    %55 = vector.multi_reduction <maximumf>, %54, %cst_19 [2] : vector<1x8x8xf32> to vector<1x8xf32>
    %56 = vector.shape_cast %55 : vector<1x8xf32> to vector<1x8x1xf32>
    %57 = vector.broadcast %56 : vector<1x8x1xf32> to vector<1x8x8xf32>
    %58 = arith.subf %54, %57 : vector<1x8x8xf32>
    %59 = math.exp %58 : vector<1x8x8xf32>
    %cst_20 = arith.constant dense<0.000000e+00> : vector<1x8xf32>
    %60 = vector.multi_reduction <add>, %59, %cst_20 [2] : vector<1x8x8xf32> to vector<1x8xf32>
    %61 = vector.shape_cast %60 : vector<1x8xf32> to vector<1x8x1xf32>
    %62 = tpu.reciprocal %61 {approx = true} : vector<1x8x1xf32> -> vector<1x8x1xf32>
    %63 = vector.broadcast %62 : vector<1x8x1xf32> to vector<1x8x8xf32>
    %64 = arith.mulf %59, %63 : vector<1x8x8xf32>
    %65 = arith.truncf %64 : vector<1x8x8xf32> to vector<1x8x8xbf16>
    "tpu.trace_start"() <{level = 10 : i32, message = "bqk,bkd->bqd"}> : () -> ()
    %cst_21 = arith.constant dense<0.000000e+00> : vector<1x8x16xf32>
    %66 = tpu.matmul %65, %52, %cst_21 {dimension_numbers = #tpu.dot_dimension_numbers<[2], [1], [1], [2], [0, 0, 0, 1, 1, 2], [0], [0]>} : vector<1x8x8xbf16>, vector<1x8x16xbf16>, vector<1x8x16xf32> -> vector<1x8x16xf32>
    "tpu.trace_stop"() : () -> ()
    %67 = vector.shape_cast %66 : vector<1x8x16xf32> to vector<8x16xf32>
    %68 = arith.truncf %67 : vector<8x16xf32> to vector<8x16xbf16>
    %c0_22 = arith.constant 0 : index
    %c16 = arith.constant 16 : index
    %c0_23 = arith.constant 0 : index
    %69 = vector.load %arg5[%c0_22, %c16, %c0_23] : memref<1x32x32xbf16, #tpu.memory_space<vmem>>, vector<1x16x32xbf16>
    %70 = vector.shape_cast %69 : vector<1x16x32xbf16> to vector<16x32xbf16>
    %cst_24 = arith.constant dense<0.000000e+00> : vector<8x32xf32>
    %71 = tpu.matmul %68, %70, %cst_24 {dimension_numbers = #tpu.dot_dimension_numbers<[1], [0], [0], [1], [0, 0, 1, 1], [], []>} : vector<8x16xbf16>, vector<16x32xbf16>, vector<8x32xf32> -> vector<8x32xf32>
    %72 = arith.addf %46, %71 : vector<8x32xf32>
    %c0_25 = arith.constant 0 : index
    %c0_26 = arith.constant 0 : index
    %c0_27 = arith.constant 0 : index
    %73 = vector.load %arg6[%c0_25, %c0_26, %c0_27] : memref<1x1x32xf32, #tpu.memory_space<vmem>>, vector<1x1x32xf32>
    %74 = vector.shape_cast %73 : vector<1x1x32xf32> to vector<1x32xf32>
    %75 = vector.broadcast %74 : vector<1x32xf32> to vector<8x32xf32>
    %76 = arith.addf %72, %75 : vector<8x32xf32>
    %77 = vector.broadcast %5 : f32 to vector<8x32xf32>
    %78 = arith.mulf %77, %76 : vector<8x32xf32>
    %79 = arith.addf %3, %78 : vector<8x32xf32>
    %80 = arith.truncf %79 : vector<8x32xf32> to vector<8x32xbf16>
    %c0_28 = arith.constant 0 : index
    %c0_29 = arith.constant 0 : index
    %c0_30 = arith.constant 0 : index
    %81 = vector.load %arg7[%c0_28, %c0_29, %c0_30] : memref<1x32x64xbf16, #tpu.memory_space<vmem>>, vector<1x32x64xbf16>
    %82 = vector.shape_cast %81 : vector<1x32x64xbf16> to vector<32x64xbf16>
    %cst_31 = arith.constant dense<0.000000e+00> : vector<8x64xf32>
    %83 = tpu.matmul %80, %82, %cst_31 {dimension_numbers = #tpu.dot_dimension_numbers<[1], [0], [0], [1], [0, 0, 1, 1], [], []>} : vector<8x32xbf16>, vector<32x64xbf16>, vector<8x64xf32> -> vector<8x64xf32>
    %c0_32 = arith.constant 0 : index
    %c0_33 = arith.constant 0 : index
    %c0_34 = arith.constant 0 : index
    %84 = vector.load %arg8[%c0_32, %c0_33, %c0_34] : memref<1x1x64xf32, #tpu.memory_space<vmem>>, vector<1x1x64xf32>
    %85 = vector.shape_cast %84 : vector<1x1x64xf32> to vector<1x64xf32>
    %86 = vector.broadcast %85 : vector<1x64xf32> to vector<8x64xf32>
    %87 = arith.addf %83, %86 : vector<8x64xf32>
    %cst_35 = arith.constant 0.000000e+00 : f32
    %88 = vector.broadcast %cst_35 : f32 to vector<8x64xf32>
    %89 = arith.maximumf %87, %88 : vector<8x64xf32>
    %90 = arith.truncf %89 : vector<8x64xf32> to vector<8x64xbf16>
    %c0_36 = arith.constant 0 : index
    %c0_37 = arith.constant 0 : index
    %c0_38 = arith.constant 0 : index
    %91 = vector.load %arg9[%c0_36, %c0_37, %c0_38] : memref<1x64x32xbf16, #tpu.memory_space<vmem>>, vector<1x64x32xbf16>
    %92 = vector.shape_cast %91 : vector<1x64x32xbf16> to vector<64x32xbf16>
    %cst_39 = arith.constant dense<0.000000e+00> : vector<8x32xf32>
    %93 = tpu.matmul %90, %92, %cst_39 {dimension_numbers = #tpu.dot_dimension_numbers<[1], [0], [0], [1], [0, 0, 1, 1], [], []>} : vector<8x64xbf16>, vector<64x32xbf16>, vector<8x32xf32> -> vector<8x32xf32>
    %c0_40 = arith.constant 0 : index
    %c0_41 = arith.constant 0 : index
    %c0_42 = arith.constant 0 : index
    %94 = vector.load %arg10[%c0_40, %c0_41, %c0_42] : memref<1x1x32xf32, #tpu.memory_space<vmem>>, vector<1x1x32xf32>
    %95 = vector.shape_cast %94 : vector<1x1x32xf32> to vector<1x32xf32>
    %96 = vector.broadcast %95 : vector<1x32xf32> to vector<8x32xf32>
    %97 = arith.addf %93, %96 : vector<8x32xf32>
    %98 = vector.broadcast %5 : f32 to vector<8x32xf32>
    %99 = arith.mulf %98, %97 : vector<8x32xf32>
    %100 = arith.addf %79, %99 : vector<8x32xf32>
    %c0_43 = arith.constant 0 : index
    %c0_44 = arith.constant 0 : index
    %101 = vector.load %arg15[%c0_43, %c0_44] : memref<8x32xf32, #tpu.memory_space<vmem>>, vector<8x32xf32>
    tpu.vector_store %arg15[%c0_43, %c0_44], %100 {strides = array<i32>} : memref<8x32xf32, #tpu.memory_space<vmem>>, vector<8x32xf32>,
    %c1_i32 = arith.constant 1 : i32
    %102 = arith.cmpi eq, %arg1, %c1_i32 : i32
    %103 = arith.extui %102 : i1 to i32
    %c0_i32_45 = arith.constant 0 : i32
    %104 = arith.cmpi ne, %103, %c0_i32_45 : i32
    scf.if %104 {
      %105 = arith.truncf %100 : vector<8x32xf32> to vector<8x32xbf16>
      %c0_46 = arith.constant 0 : index
      %c0_47 = arith.constant 0 : index
      %106 = vector.load %arg11[%c0_46, %c0_47] : memref<32x128xbf16, #tpu.memory_space<vmem>>, vector<32x128xbf16>
      %cst_48 = arith.constant dense<0.000000e+00> : vector<8x128xf32>
      %107 = tpu.matmul %105, %106, %cst_48 {dimension_numbers = #tpu.dot_dimension_numbers<[1], [0], [0], [1], [0, 0, 1, 1], [], []>} : vector<8x32xbf16>, vector<32x128xbf16>, vector<8x128xf32> -> vector<8x128xf32>
      %c0_49 = arith.constant 0 : index
      %c0_50 = arith.constant 0 : index
      %108 = vector.load %arg12[%c0_49, %c0_50] : memref<1x128xf32, #tpu.memory_space<vmem>>, vector<1x128xf32>
      %109 = vector.broadcast %108 : vector<1x128xf32> to vector<8x128xf32>
      %110 = arith.addf %107, %109 : vector<8x128xf32>
      %c0_51 = arith.constant 0 : index
      %c0_52 = arith.constant 0 : index
      %111 = vector.load %arg14[%c0_51, %c0_52] : memref<8x128xf32, #tpu.memory_space<vmem>>, vector<8x128xf32>
      tpu.vector_store %arg14[%c0_51, %c0_52], %110 {strides = array<i32>} : memref<8x128xf32, #tpu.memory_space<vmem>>, vector<8x128xf32>,
    } else {
    }
    return
  }
  func.func @transform_0(%arg0: i32, %arg1: i32) -> (i32, i32) {
    %c0_i32 = arith.constant 0 : i32
    %c0_i32_0 = arith.constant 0 : i32
    return %arg0, %c0_i32 : i32, i32
  }
  func.func @transform_1(%arg0: i32, %arg1: i32) -> (i32, i32, i32) {
    %c0_i32 = arith.constant 0 : i32
    %c0_i32_0 = arith.constant 0 : i32
    %c0_i32_1 = arith.constant 0 : i32
    return %arg1, %c0_i32, %c0_i32_0 : i32, i32, i32
  }
  func.func @transform_2(%arg0: i32, %arg1: i32) -> (i32, i32, i32) {
    %c0_i32 = arith.constant 0 : i32
    %c0_i32_0 = arith.constant 0 : i32
    %c0_i32_1 = arith.constant 0 : i32
    return %arg1, %c0_i32, %c0_i32_0 : i32, i32, i32
  }
  func.func @transform_3(%arg0: i32, %arg1: i32) -> (i32, i32, i32) {
    %c0_i32 = arith.constant 0 : i32
    %c0_i32_0 = arith.constant 0 : i32
    %c0_i32_1 = arith.constant 0 : i32
    return %arg1, %c0_i32, %c0_i32_0 : i32, i32, i32
  }
  func.func @transform_4(%arg0: i32, %arg1: i32) -> (i32, i32, i32) {
    %c0_i32 = arith.constant 0 : i32
    %c0_i32_0 = arith.constant 0 : i32
    %c0_i32_1 = arith.constant 0 : i32
    return %arg1, %c0_i32, %c0_i32_0 : i32, i32, i32
  }
  func.func @transform_5(%arg0: i32, %arg1: i32) -> (i32, i32, i32) {
    %c0_i32 = arith.constant 0 : i32
    %c0_i32_0 = arith.constant 0 : i32
    %c0_i32_1 = arith.constant 0 : i32
    return %arg1, %c0_i32, %c0_i32_0 : i32, i32, i32
  }
  func.func @transform_6(%arg0: i32, %arg1: i32) -> (i32, i32, i32) {
    %c0_i32 = arith.constant 0 : i32
    %c0_i32_0 = arith.constant 0 : i32
    %c0_i32_1 = arith.constant 0 : i32
    return %arg1, %c0_i32, %c0_i32_0 : i32, i32, i32
  }
  func.func @transform_7(%arg0: i32, %arg1: i32) -> (i32, i32, i32) {
    %c0_i32 = arith.constant 0 : i32
    %c0_i32_0 = arith.constant 0 : i32
    %c0_i32_1 = arith.constant 0 : i32
    return %arg1, %c0_i32, %c0_i32_0 : i32, i32, i32
  }
  func.func @transform_8(%arg0: i32, %arg1: i32) -> (i32, i32, i32) {
    %c0_i32 = arith.constant 0 : i32
    %c0_i32_0 = arith.constant 0 : i32
    %c0_i32_1 = arith.constant 0 : i32
    return %arg1, %c0_i32, %c0_i32_0 : i32, i32, i32
  }
  func.func @transform_9(%arg0: i32, %arg1: i32) -> (i32, i32) {
    %c0_i32 = arith.constant 0 : i32
    %c0_i32_0 = arith.constant 0 : i32
    %c0_i32_1 = arith.constant 0 : i32
    return %c0_i32, %c0_i32_0 : i32, i32
  }
  func.func @transform_10(%arg0: i32, %arg1: i32) -> (i32, i32) {
    %c0_i32 = arith.constant 0 : i32
    %c0_i32_0 = arith.constant 0 : i32
    %c0_i32_1 = arith.constant 0 : i32
    return %c0_i32, %c0_i32_0 : i32, i32
  }
  func.func @transform_11(%arg0: i32, %arg1: i32) -> i32 {
    %c0_i32 = arith.constant 0 : i32
    %c0_i32_0 = arith.constant 0 : i32
    return %c0_i32 : i32
  }
  func.func @transform_12(%arg0: i32, %arg1: i32) -> (i32, i32) {
    %c0_i32 = arith.constant 0 : i32
    %c0_i32_0 = arith.constant 0 : i32
    return %arg0, %c0_i32 : i32, i32
  }
}

</mosaic_0001>

<llo_original>
// kernel: sketch_model_forward.1
$region0: #{sketch_model_forward.1}
  #allocation0 [shape = 'u32[]', space=smem, size = 0x4, offset = 0x4, fixed_abs, tag = 'smem constant byte address 0x4 - core index']
  #allocation1 [shape = 'u32[72,128]{1,0:T(1,128)}', space=vmem, size = 0x9000, scoped, tag = 'internal scratch']
  #allocation2 [shape = 'f32[8,32]{1,0:T(8,128)}', space=vmem, size = 0x1000, scoped, tag = 'scratch operand']
  %s0 = inlined_call_operand.vmem [shape: f32[16,32], index: 0, kind: input, shape index: {}]
  %s1 = inlined_call_operand.vmem [shape: bf16[2,32,96], index: 1, kind: input, shape index: {}]
  %s2 = inlined_call_operand.vmem [shape: f32[2,1,96], index: 2, kind: input, shape index: {}]
  %s3 = inlined_call_operand.vmem [shape: bf16[2,32,32], index: 3, kind: input, shape index: {}]
  %s4 = inlined_call_operand.vmem [shape: f32[2,1,32], index: 4, kind: input, shape index: {}]
  %s5 = inlined_call_operand.vmem [shape: bf16[2,32,64], index: 5, kind: input, shape index: {}]
  %s6 = inlined_call_operand.vmem [shape: f32[2,1,64], index: 6, kind: input, shape index: {}]
  %s7 = inlined_call_operand.vmem [shape: bf16[2,64,32], index: 7, kind: input, shape index: {}]
  %s8 = inlined_call_operand.vmem [shape: f32[2,1,32], index: 8, kind: input, shape index: {}]
  %s9 = inlined_call_operand.vmem [shape: bf16[32,128], index: 9, kind: input, shape index: {}]
  %s10 = inlined_call_operand.vmem [shape: f32[1,128], index: 10, kind: input, shape index: {}]
  %s11 = inlined_call_operand.vmem [shape: f32[2], index: 11, kind: input, shape index: {}]
  %s12 = inlined_call_operand.vmem [shape: f32[16,128], index: 12, kind: output, shape index: {}]
  %s13 = sld [smem:[#allocation0]]
  $region93: #{sketch_model_forward.1} parent=0
    _
  %s15 = ssub.s32 1, %s13
  %s16 = scalar_select 0, %s15, %s13
  $region1: #{sketch_model_forward.1} parent=0
    #allocation3 [shape = 'u8[512]{0}', space=smem, size = 0x200, scoped, tag = 'input window, operand 11, single buffered']
    #allocation4 [shape = 's32[2]{0}', space=sflag, size = 0x8, scoped, tag = 'scoped memory for sketch_model_forward.1']
    %17 = vsyncpa [#allocation4], 0
    loop: start=0, step=1, limit=6
    $region2: #{sketch_model_forward.1} parent=1 // loop_pre_header
      _
    $region3: #{sketch_model_forward.1} parent=1 // loop_header
      %s19 = sphi 0, %s23
      %p20 = scmp.ge.s32.totalorder %s19, 6
      %s26 = sphi 0, %s38
      %s27 = sphi 0, %s34
      %s28 = sphi 0, %s26
      %s29 = sphi 0, %s27
      %s30 = sphi 0, %s28
      %s31 = sphi 0, %s29
      %s41 = sphi 0, %s43
      %s44 = sphi 0, %s41
      %s45 = sphi 0, %s44
      %s61 = sphi 0, %s45
      %s67 = sphi 0, %s69
      %s70 = sphi 0, %s67
      %s71 = sphi 0, %s70
      %s87 = sphi 0, %s71
      %s93 = sphi 0, %s95
      %s96 = sphi 0, %s93
      %s97 = sphi 0, %s96
      %s113 = sphi 0, %s97
      %s119 = sphi 0, %s121
      %s122 = sphi 0, %s119
      %s123 = sphi 0, %s122
      %s139 = sphi 0, %s123
      %s145 = sphi 0, %s147
      %s148 = sphi 0, %s145
      %s149 = sphi 0, %s148
      %s165 = sphi 0, %s149
      %s171 = sphi 0, %s173
      %s174 = sphi 0, %s171
      %s175 = sphi 0, %s174
      %s191 = sphi 0, %s175
      %s197 = sphi 0, %s199
      %s200 = sphi 0, %s197
      %s201 = sphi 0, %s200
      %s217 = sphi 0, %s201
      %s223 = sphi 0, %s225
      %s226 = sphi 0, %s223
      %s227 = sphi 0, %s226
      %s243 = sphi 0, %s227
      %s249 = sphi 0, %s251
      %s252 = sphi 0, %s249
      %s253 = sphi 0, %s252
      %s269 = sphi 0, %s253
      %s273 = sphi 0, %s273
      %s275 = sphi 0, %s273
      %s276 = sphi 0, %s275
      %s290 = sphi 0, %s276
      %s294 = sphi 0, %s294
      %s296 = sphi 0, %s294
      %s297 = sphi 0, %s296
      %s311 = sphi 0, %s297
      %s315 = sphi 0, %s315
      %s317 = sphi 0, %s315
      %s318 = sphi 0, %s317
      %s332 = sphi 0, %s318
      %s338 = sphi 0, %s340
      %s341 = sphi 0, %s338
      %s342 = sphi 0, %s341
      %s358 = sphi 0, %s342
    $region4: #{sketch_model_forward.1} parent=1 // loop_header_branch
      %22 = sbr.rel (%p20) target = $region8
    $region5: #{sketch_model_forward.1} parent=1 // loop_body
      %s24 = ssub.s32 %s19, 1
      %s25 = ssub.s32 %s19, 2
      %s32 = sadd.s32 1, %s27
      %p33 = scmp.ge.s32.totalorder %s32, 2
      %s34 = scalar_select %p33, 0, %s32
      %s35 = sadd.s32 1, %s26
      %s36 = scalar_select %p33, %s35, %s26
      %p37 = scmp.ge.s32.totalorder %s36, 2
      %s38 = scalar_select %p37, 0, %s36
      %s39 = ssub.s32 %s26, %s38
      %p40 = scmp.eq.s32.totalorder %s39, 0
      %s42 = sadd.s32 %s41, 1
      %s43 = scalar_select %p40, %s41, %s42
      %p46 = pneg %p40
      %p47 = scmp.eq.s32.totalorder %s19, 3
      %p48 = por %p46, %p47
      %p49 = scmp.ne.s32.totalorder %s41, %s44
      %p50 = scmp.eq.s32.totalorder %s19, 0
      %p51 = por %p49, %p50
      %p52 = scmp.ne.s32.totalorder %s41, %s44
      %p53 = scmp.eq.s32.totalorder %s24, 3
      %p54 = por %p52, %p53
      %p55 = scmp.ne.s32.totalorder %s44, %s45
      %p56 = scmp.eq.s32.totalorder %s24, 0
      %p57 = por %p55, %p56
      %p58 = scmp.ne.s32.totalorder %s44, %s45
      %p59 = scmp.eq.s32.totalorder %s25, 3
      %p60 = por %p58, %p59
      %p62 = scmp.ne.s32.totalorder %s45, %s61
      %p63 = scmp.eq.s32.totalorder %s25, 0
      %p64 = por %p62, %p63
      %s65 = ssub.s32 %s27, %s34
      %p66 = scmp.eq.s32.totalorder %s65, 0
      %s68 = sadd.s32 %s67, 1
      %s69 = scalar_select %p66, %s67, %s68
      %p72 = pneg %p66
      %p73 = scmp.eq.s32.totalorder %s19, 3
      %p74 = por %p72, %p73
      %p75 = scmp.ne.s32.totalorder %s67, %s70
      %p76 = scmp.eq.s32.totalorder %s19, 0
      %p77 = por %p75, %p76
      %p78 = scmp.ne.s32.totalorder %s67, %s70
      %p79 = scmp.eq.s32.totalorder %s24, 3
      %p80 = por %p78, %p79
      %p81 = scmp.ne.s32.totalorder %s70, %s71
      %p82 = scmp.eq.s32.totalorder %s24, 0
      %p83 = por %p81, %p82
      %p84 = scmp.ne.s32.totalorder %s70, %s71
      %p85 = scmp.eq.s32.totalorder %s25, 3
      %p86 = por %p84, %p85
      %p88 = scmp.ne.s32.totalorder %s71, %s87
      %p89 = scmp.eq.s32.totalorder %s25, 0
      %p90 = por %p88, %p89
      %s91 = ssub.s32 %s27, %s34
      %p92 = scmp.eq.s32.totalorder %s91, 0
      %s94 = sadd.s32 %s93, 1
      %s95 = scalar_select %p92, %s93, %s94
      %p98 = pneg %p92
      %p99 = scmp.eq.s32.totalorder %s19, 3
      %p100 = por %p98, %p99
      %p101 = scmp.ne.s32.totalorder %s93, %s96
      %p102 = scmp.eq.s32.totalorder %s19, 0
      %p103 = por %p101, %p102
      %p104 = scmp.ne.s32.totalorder %s93, %s96
      %p105 = scmp.eq.s32.totalorder %s24, 3
      %p106 = por %p104, %p105
      %p107 = scmp.ne.s32.totalorder %s96, %s97
      %p108 = scmp.eq.s32.totalorder %s24, 0
      %p109 = por %p107, %p108
      %p110 = scmp.ne.s32.totalorder %s96, %s97
      %p111 = scmp.eq.s32.totalorder %s25, 3
      %p112 = por %p110, %p111
      %p114 = scmp.ne.s32.totalorder %s97, %s113
      %p115 = scmp.eq.s32.totalorder %s25, 0
      %p116 = por %p114, %p115
      %s117 = ssub.s32 %s27, %s34
      %p118 = scmp.eq.s32.totalorder %s117, 0
      %s120 = sadd.s32 %s119, 1
      %s121 = scalar_select %p118, %s119, %s120
      %p124 = pneg %p118
      %p125 = scmp.eq.s32.totalorder %s19, 3
      %p126 = por %p124, %p125
      %p127 = scmp.ne.s32.totalorder %s119, %s122
      %p128 = scmp.eq.s32.totalorder %s19, 0
      %p129 = por %p127, %p128
      %p130 = scmp.ne.s32.totalorder %s119, %s122
      %p131 = scmp.eq.s32.totalorder %s24, 3
      %p132 = por %p130, %p131
      %p133 = scmp.ne.s32.totalorder %s122, %s123
      %p134 = scmp.eq.s32.totalorder %s24, 0
      %p135 = por %p133, %p134
      %p136 = scmp.ne.s32.totalorder %s122, %s123
      %p137 = scmp.eq.s32.totalorder %s25, 3
      %p138 = por %p136, %p137
      %p140 = scmp.ne.s32.totalorder %s123, %s139
      %p141 = scmp.eq.s32.totalorder %s25, 0
      %p142 = por %p140, %p141
      %s143 = ssub.s32 %s27, %s34
      %p144 = scmp.eq.s32.totalorder %s143, 0
      %s146 = sadd.s32 %s145, 1
      %s147 = scalar_select %p144, %s145, %s146
      %p150 = pneg %p144
      %p151 = scmp.eq.s32.totalorder %s19, 3
      %p152 = por %p150, %p151
      %p153 = scmp.ne.s32.totalorder %s145, %s148
      %p154 = scmp.eq.s32.totalorder %s19, 0
      %p155 = por %p153, %p154
      %p156 = scmp.ne.s32.totalorder %s145, %s148
      %p157 = scmp.eq.s32.totalorder %s24, 3
      %p158 = por %p156, %p157
      %p159 = scmp.ne.s32.totalorder %s148, %s149
      %p160 = scmp.eq.s32.totalorder %s24, 0
      %p161 = por %p159, %p160
      %p162 = scmp.ne.s32.totalorder %s148, %s149
      %p163 = scmp.eq.s32.totalorder %s25, 3
      %p164 = por %p162, %p163
      %p166 = scmp.ne.s32.totalorder %s149, %s165
      %p167 = scmp.eq.s32.totalorder %s25, 0
      %p168 = por %p166, %p167
      %s169 = ssub.s32 %s27, %s34
      %p170 = scmp.eq.s32.totalorder %s169, 0
      %s172 = sadd.s32 %s171, 1
      %s173 = scalar_select %p170, %s171, %s172
      %p176 = pneg %p170
      %p177 = scmp.eq.s32.totalorder %s19, 3
      %p178 = por %p176, %p177
      %p179 = scmp.ne.s32.totalorder %s171, %s174
      %p180 = scmp.eq.s32.totalorder %s19, 0
      %p181 = por %p179, %p180
      %p182 = scmp.ne.s32.totalorder %s171, %s174
      %p183 = scmp.eq.s32.totalorder %s24, 3
      %p184 = por %p182, %p183
      %p185 = scmp.ne.s32.totalorder %s174, %s175
      %p186 = scmp.eq.s32.totalorder %s24, 0
      %p187 = por %p185, %p186
      %p188 = scmp.ne.s32.totalorder %s174, %s175
      %p189 = scmp.eq.s32.totalorder %s25, 3
      %p190 = por %p188, %p189
      %p192 = scmp.ne.s32.totalorder %s175, %s191
      %p193 = scmp.eq.s32.totalorder %s25, 0
      %p194 = por %p192, %p193
      %s195 = ssub.s32 %s27, %s34
      %p196 = scmp.eq.s32.totalorder %s195, 0
      %s198 = sadd.s32 %s197, 1
      %s199 = scalar_select %p196, %s197, %s198
      %p202 = pneg %p196
      %p203 = scmp.eq.s32.totalorder %s19, 3
      %p204 = por %p202, %p203
      %p205 = scmp.ne.s32.totalorder %s197, %s200
      %p206 = scmp.eq.s32.totalorder %s19, 0
      %p207 = por %p205, %p206
      %p208 = scmp.ne.s32.totalorder %s197, %s200
      %p209 = scmp.eq.s32.totalorder %s24, 3
      %p210 = por %p208, %p209
      %p211 = scmp.ne.s32.totalorder %s200, %s201
      %p212 = scmp.eq.s32.totalorder %s24, 0
      %p213 = por %p211, %p212
      %p214 = scmp.ne.s32.totalorder %s200, %s201
      %p215 = scmp.eq.s32.totalorder %s25, 3
      %p216 = por %p214, %p215
      %p218 = scmp.ne.s32.totalorder %s201, %s217
      %p219 = scmp.eq.s32.totalorder %s25, 0
      %p220 = por %p218, %p219
      %s221 = ssub.s32 %s27, %s34
      %p222 = scmp.eq.s32.totalorder %s221, 0
      %s224 = sadd.s32 %s223, 1
      %s225 = scalar_select %p222, %s223, %s224
      %p228 = pneg %p222
      %p229 = scmp.eq.s32.totalorder %s19, 3
      %p230 = por %p228, %p229
      %p231 = scmp.ne.s32.totalorder %s223, %s226
      %p232 = scmp.eq.s32.totalorder %s19, 0
      %p233 = por %p231, %p232
      %p234 = scmp.ne.s32.totalorder %s223, %s226
      %p235 = scmp.eq.s32.totalorder %s24, 3
      %p236 = por %p234, %p235
      %p237 = scmp.ne.s32.totalorder %s226, %s227
      %p238 = scmp.eq.s32.totalorder %s24, 0
      %p239 = por %p237, %p238
      %p240 = scmp.ne.s32.totalorder %s226, %s227
      %p241 = scmp.eq.s32.totalorder %s25, 3
      %p242 = por %p240, %p241
      %p244 = scmp.ne.s32.totalorder %s227, %s243
      %p245 = scmp.eq.s32.totalorder %s25, 0
      %p246 = por %p244, %p245
      %s247 = ssub.s32 %s27, %s34
      %p248 = scmp.eq.s32.totalorder %s247, 0
      %s250 = sadd.s32 %s249, 1
      %s251 = scalar_select %p248, %s249, %s250
      %p254 = pneg %p248
      %p255 = scmp.eq.s32.totalorder %s19, 3
      %p256 = por %p254, %p255
      %p257 = scmp.ne.s32.totalorder %s249, %s252
      %p258 = scmp.eq.s32.totalorder %s19, 0
      %p259 = por %p257, %p258
      %p260 = scmp.ne.s32.totalorder %s249, %s252
      %p261 = scmp.eq.s32.totalorder %s24, 3
      %p262 = por %p260, %p261
      %p263 = scmp.ne.s32.totalorder %s252, %s253
      %p264 = scmp.eq.s32.totalorder %s24, 0
      %p265 = por %p263, %p264
      %p266 = scmp.ne.s32.totalorder %s252, %s253
      %p267 = scmp.eq.s32.totalorder %s25, 3
      %p268 = por %p266, %p267
      %p270 = scmp.ne.s32.totalorder %s253, %s269
      %p271 = scmp.eq.s32.totalorder %s25, 0
      %p272 = por %p270, %p271
      %s274 = sadd.s32 %s273, 1
      %p277 = scmp.eq.s32.totalorder %s19, 3
      %p278 = scmp.ne.s32.totalorder %s273, %s275
      %p279 = scmp.eq.s32.totalorder %s19, 0
      %p280 = por %p278, %p279
      %p281 = scmp.ne.s32.totalorder %s273, %s275
      %p282 = scmp.eq.s32.totalorder %s24, 3
      %p283 = por %p281, %p282
      %p284 = scmp.ne.s32.totalorder %s275, %s276
      %p285 = scmp.eq.s32.totalorder %s24, 0
      %p286 = por %p284, %p285
      %p287 = scmp.ne.s32.totalorder %s275, %s276
      %p288 = scmp.eq.s32.totalorder %s25, 3
      %p289 = por %p287, %p288
      %p291 = scmp.ne.s32.totalorder %s276, %s290
      %p292 = scmp.eq.s32.totalorder %s25, 0
      %p293 = por %p291, %p292
      %s295 = sadd.s32 %s294, 1
      %p298 = scmp.eq.s32.totalorder %s19, 3
      %p299 = scmp.ne.s32.totalorder %s294, %s296
      %p300 = scmp.eq.s32.totalorder %s19, 0
      %p301 = por %p299, %p300
      %p302 = scmp.ne.s32.totalorder %s294, %s296
      %p303 = scmp.eq.s32.totalorder %s24, 3
      %p304 = por %p302, %p303
      %p305 = scmp.ne.s32.totalorder %s296, %s297
      %p306 = scmp.eq.s32.totalorder %s24, 0
      %p307 = por %p305, %p306
      %p308 = scmp.ne.s32.totalorder %s296, %s297
      %p309 = scmp.eq.s32.totalorder %s25, 3
      %p310 = por %p308, %p309
      %p312 = scmp.ne.s32.totalorder %s297, %s311
      %p313 = scmp.eq.s32.totalorder %s25, 0
      %p314 = por %p312, %p313
      %s316 = sadd.s32 %s315, 1
      %p319 = scmp.eq.s32.totalorder %s19, 3
      %p320 = scmp.ne.s32.totalorder %s315, %s317
      %p321 = scmp.eq.s32.totalorder %s19, 0
      %p322 = por %p320, %p321
      %p323 = scmp.ne.s32.totalorder %s315, %s317
      %p324 = scmp.eq.s32.totalorder %s24, 3
      %p325 = por %p323, %p324
      %p326 = scmp.ne.s32.totalorder %s317, %s318
      %p327 = scmp.eq.s32.totalorder %s24, 0
      %p328 = por %p326, %p327
      %p329 = scmp.ne.s32.totalorder %s317, %s318
      %p330 = scmp.eq.s32.totalorder %s25, 3
      %p331 = por %p329, %p330
      %p333 = scmp.ne.s32.totalorder %s318, %s332
      %p334 = scmp.eq.s32.totalorder %s25, 0
      %p335 = por %p333, %p334
      %s336 = ssub.s32 %s26, %s38
      %p337 = scmp.eq.s32.totalorder %s336, 0
      %s339 = sadd.s32 %s338, 1
      %s340 = scalar_select %p337, %s338, %s339
      %p343 = pneg %p337
      %p344 = scmp.eq.s32.totalorder %s19, 3
      %p345 = por %p343, %p344
      %p346 = scmp.ne.s32.totalorder %s338, %s341
      %p347 = scmp.eq.s32.totalorder %s19, 0
      %p348 = por %p346, %p347
      %p349 = scmp.ne.s32.totalorder %s338, %s341
      %p350 = scmp.eq.s32.totalorder %s24, 3
      %p351 = por %p349, %p350
      %p352 = scmp.ne.s32.totalorder %s341, %s342
      %p353 = scmp.eq.s32.totalorder %s24, 0
      %p354 = por %p352, %p353
      %p355 = scmp.ne.s32.totalorder %s341, %s342
      %p356 = scmp.eq.s32.totalorder %s25, 3
      %p357 = por %p355, %p356
      %p359 = scmp.ne.s32.totalorder %s342, %s358
      %p360 = scmp.eq.s32.totalorder %s25, 0
      %p361 = por %p359, %p360
      %p362 = scmp.le.s32.totalorder 1, %s19
      %p363 = scmp.lt.s32.totalorder %s19, 5
      %p364 = pnand %p362, %p363
      %p365 = pneg %p364
      // Predicated region
      $region9: #{sketch_model_forward.1} parent=5 // pred_check
        _
      $region10: #{sketch_model_forward.1} parent=5 // pred_check_branch
        %367 = sbr.rel (%p364) target = $region12
      $region11: #{sketch_model_forward.1} parent=5 // pred_region
        %s368 = ssub.s32 %s19, 1
        // Predicated region
        $region13: #{sketch_model_forward.1} parent=11 // pred_check
          %p369 = pneg %p286
        $region14: #{sketch_model_forward.1} parent=11 // pred_check_branch
          %371 = sbr.rel (%p369) target = $region16
        $region15: #{sketch_model_forward.1} parent=11 // pred_region
          _
        $region16: #{sketch_model_forward.1} parent=11 // pred_fallthru
          _
        // Predicated region
        $region17: #{sketch_model_forward.1} parent=11 // pred_check
          %p372 = pneg %p307
        $region18: #{sketch_model_forward.1} parent=11 // pred_check_branch
          %374 = sbr.rel (%p372) target = $region20
        $region19: #{sketch_model_forward.1} parent=11 // pred_region
          _
        $region20: #{sketch_model_forward.1} parent=11 // pred_fallthru
          _
        // Predicated region
        $region21: #{sketch_model_forward.1} parent=11 // pred_check
          %p375 = pneg %p328
        $region22: #{sketch_model_forward.1} parent=11 // pred_check_branch
          %377 = sbr.rel (%p375) target = $region24
        $region23: #{sketch_model_forward.1} parent=11 // pred_region
          %379 = vsyncadd [#allocation4], 0
          %s381 = sshll.u32 %s11, 4
          %s382 = int_to_ptr.vmem [resolvable:$true] %s381
          %384 = dma.vmem_to_smem %s382, 16, [#allocation3], [#allocation4]
        $region24: #{sketch_model_forward.1} parent=11 // pred_fallthru
          _
      $region12: #{sketch_model_forward.1} parent=5 // pred_fallthru
        _
      %p385 = scmp.lt.s32.totalorder %s19, 4
      // Predicated region
      $region25: #{sketch_model_forward.1} parent=5 // pred_check
        %p386 = pneg %p385
      $region26: #{sketch_model_forward.1} parent=5 // pred_check_branch
        %388 = sbr.rel (%p386) target = $region28
      $region27: #{sketch_model_forward.1} parent=5 // pred_region
        // Predicated region
        $region29: #{sketch_model_forward.1} parent=27 // pred_check
          %p389 = pneg %p51
        $region30: #{sketch_model_forward.1} parent=27 // pred_check_branch
          %391 = sbr.rel (%p389) target = $region32
        $region31: #{sketch_model_forward.1} parent=27 // pred_region
          %p392 = scmp.lt.s32.totalorder %s26, 1
          %s393 = scalar_select %p392, %s26, 1
          %s394 = smul.addr %s393, 8
          %s395 = scalar_lea.vmem %s0, %s394
        $region32: #{sketch_model_forward.1} parent=27 // pred_fallthru
          _
        // Predicated region
        $region33: #{sketch_model_forward.1} parent=27 // pred_check
          %p396 = pneg %p77
        $region34: #{sketch_model_forward.1} parent=27 // pred_check_branch
          %398 = sbr.rel (%p396) target = $region36
        $region35: #{sketch_model_forward.1} parent=27 // pred_region
          %p399 = scmp.lt.s32.totalorder %s27, 1
          %s400 = scalar_select %p399, %s27, 1
          %s401 = smul.addr %s400, 4
          %s402 = smul.addr %s401, 4
          %s403 = scalar_lea.vmem %s1, %s402
        $region36: #{sketch_model_forward.1} parent=27 // pred_fallthru
          _
        // Predicated region
        $region37: #{sketch_model_forward.1} parent=27 // pred_check
          %p404 = pneg %p103
        $region38: #{sketch_model_forward.1} parent=27 // pred_check_branch
          %406 = sbr.rel (%p404) target = $region40
        $region39: #{sketch_model_forward.1} parent=27 // pred_region
          %p407 = scmp.lt.s32.totalorder %s27, 1
          %s408 = scalar_select %p407, %s27, 1
          %s409 = scalar_lea.vmem %s2, %s408
        $region40: #{sketch_model_forward.1} parent=27 // pred_fallthru
          _
        // Predicated region
        $region41: #{sketch_model_forward.1} parent=27 // pred_check
          %p410 = pneg %p129
        $region42: #{sketch_model_forward.1} parent=27 // pred_check_branch
          %412 = sbr.rel (%p410) target = $region44
        $region43: #{sketch_model_forward.1} parent=27 // pred_region
          %p413 = scmp.lt.s32.totalorder %s27, 1
          %s414 = scalar_select %p413, %s27, 1
          %s415 = smul.addr %s414, 4
          %s416 = smul.addr %s415, 4
          %s417 = scalar_lea.vmem %s3, %s416
        $region44: #{sketch_model_forward.1} parent=27 // pred_fallthru
          _
        // Predicated region
        $region45: #{sketch_model_forward.1} parent=27 // pred_check
          %p418 = pneg %p155
        $region46: #{sketch_model_forward.1} parent=27 // pred_check_branch
          %420 = sbr.rel (%p418) target = $region48
        $region47: #{sketch_model_forward.1} parent=27 // pred_region
          %p421 = scmp.lt.s32.totalorder %s27, 1
          %s422 = scalar_select %p421, %s27, 1
          %s423 = scalar_lea.vmem %s4, %s422
        $region48: #{sketch_model_forward.1} parent=27 // pred_fallthru
          _
        // Predicated region
        $region49: #{sketch_model_forward.1} parent=27 // pred_check
          %p424 = pneg %p181
        $region50: #{sketch_model_forward.1} parent=27 // pred_check_branch
          %426 = sbr.rel (%p424) target = $region52
        $region51: #{sketch_model_forward.1} parent=27 // pred_region
          %p427 = scmp.lt.s32.totalorder %s27, 1
          %s428 = scalar_select %p427, %s27, 1
          %s429 = smul.addr %s428, 4
          %s430 = smul.addr %s429, 4
          %s431 = scalar_lea.vmem %s5, %s430
        $region52: #{sketch_model_forward.1} parent=27 // pred_fallthru
          _
        // Predicated region
        $region53: #{sketch_model_forward.1} parent=27 // pred_check
          %p432 = pneg %p207
        $region54: #{sketch_model_forward.1} parent=27 // pred_check_branch
          %434 = sbr.rel (%p432) target = $region56
        $region55: #{sketch_model_forward.1} parent=27 // pred_region
          %p435 = scmp.lt.s32.totalorder %s27, 1
          %s436 = scalar_select %p435, %s27, 1
          %s437 = scalar_lea.vmem %s6, %s436
        $region56: #{sketch_model_forward.1} parent=27 // pred_fallthru
          _
        // Predicated region
        $region57: #{sketch_model_forward.1} parent=27 // pred_check
          %p438 = pneg %p233
        $region58: #{sketch_model_forward.1} parent=27 // pred_check_branch
          %440 = sbr.rel (%p438) target = $region60
        $region59: #{sketch_model_forward.1} parent=27 // pred_region
          %p441 = scmp.lt.s32.totalorder %s27, 1
          %s442 = scalar_select %p441, %s27, 1
          %s443 = smul.addr %s442, 8
          %s444 = smul.addr %s443, 4
          %s445 = scalar_lea.vmem %s7, %s444
        $region60: #{sketch_model_forward.1} parent=27 // pred_fallthru
          _
        // Predicated region
        $region61: #{sketch_model_forward.1} parent=27 // pred_check
          %p446 = pneg %p259
        $region62: #{sketch_model_forward.1} parent=27 // pred_check_branch
          %448 = sbr.rel (%p446) target = $region64
        $region63: #{sketch_model_forward.1} parent=27 // pred_region
          %p449 = scmp.lt.s32.totalorder %s27, 1
          %s450 = scalar_select %p449, %s27, 1
          %s451 = scalar_lea.vmem %s8, %s450
        $region64: #{sketch_model_forward.1} parent=27 // pred_fallthru
          _
      $region28: #{sketch_model_forward.1} parent=5 // pred_fallthru
        _
      %p452 = scmp.le.s32.totalorder 1, %s19
      %p453 = scmp.lt.s32.totalorder %s19, 5
      %p454 = pnand %p452, %p453
      %p455 = pneg %p454
      // Predicated region
      $region65: #{sketch_model_forward.1} parent=5 // pred_check
        _
      $region66: #{sketch_model_forward.1} parent=5 // pred_check_branch
        %457 = sbr.rel (%p454) target = $region68
      $region67: #{sketch_model_forward.1} parent=5 // pred_region
        %s458 = ssub.s32 %s19, 1
        // Predicated region
        $region69: #{sketch_model_forward.1} parent=67 // pred_check
          %p459 = pneg %p328
        $region70: #{sketch_model_forward.1} parent=67 // pred_check_branch
          %461 = sbr.rel (%p459) target = $region72
        $region71: #{sketch_model_forward.1} parent=67 // pred_region
          %463 = dma.done [#allocation4], 16
        $region72: #{sketch_model_forward.1} parent=67 // pred_fallthru
          _
        %464 = sfence
        %p465 = scmp.lt.s32.totalorder %s28, 1
        %s466 = scalar_select %p465, %s28, 1
        %s467 = smul.addr %s466, 8
        %s468 = scalar_lea.vmem %s0, %s467
        %p469 = pneg %p57
        %p470 = pneg %p54
        %p471 = scmp.lt.s32.totalorder %s29, 1
        %s472 = scalar_select %p471, %s29, 1
        %s473 = smul.addr %s472, 4
        %s474 = smul.addr %s473, 4
        %s475 = scalar_lea.vmem %s1, %s474
        %p476 = pneg %p83
        %p477 = pneg %p80
        %p478 = scmp.lt.s32.totalorder %s29, 1
        %s479 = scalar_select %p478, %s29, 1
        %s480 = scalar_lea.vmem %s2, %s479
        %p481 = pneg %p109
        %p482 = pneg %p106
        %p483 = scmp.lt.s32.totalorder %s29, 1
        %s484 = scalar_select %p483, %s29, 1
        %s485 = smul.addr %s484, 4
        %s486 = smul.addr %s485, 4
        %s487 = scalar_lea.vmem %s3, %s486
        %p488 = pneg %p135
        %p489 = pneg %p132
        %p490 = scmp.lt.s32.totalorder %s29, 1
        %s491 = scalar_select %p490, %s29, 1
        %s492 = scalar_lea.vmem %s4, %s491
        %p493 = pneg %p161
        %p494 = pneg %p158
        %p495 = scmp.lt.s32.totalorder %s29, 1
        %s496 = scalar_select %p495, %s29, 1
        %s497 = smul.addr %s496, 4
        %s498 = smul.addr %s497, 4
        %s499 = scalar_lea.vmem %s5, %s498
        %p500 = pneg %p187
        %p501 = pneg %p184
        %p502 = scmp.lt.s32.totalorder %s29, 1
        %s503 = scalar_select %p502, %s29, 1
        %s504 = scalar_lea.vmem %s6, %s503
        %p505 = pneg %p213
        %p506 = pneg %p210
        %p507 = scmp.lt.s32.totalorder %s29, 1
        %s508 = scalar_select %p507, %s29, 1
        %s509 = smul.addr %s508, 8
        %s510 = smul.addr %s509, 4
        %s511 = scalar_lea.vmem %s7, %s510
        %p512 = pneg %p239
        %p513 = pneg %p236
        %p514 = scmp.lt.s32.totalorder %s29, 1
        %s515 = scalar_select %p514, %s29, 1
        %s516 = scalar_lea.vmem %s8, %s515
        %p517 = pneg %p265
        %p518 = pneg %p262
        %p519 = pneg %p286
        %p520 = pneg %p283
        %p521 = pneg %p307
        %p522 = pneg %p304
        %p523 = pneg %p328
        %p524 = pneg %p325
        %p525 = pneg %p354
        %p526 = pneg %p351
        %p527 = scmp.lt.s32.totalorder %s28, 1
        %s528 = scalar_select %p527, %s28, 1
        %s529 = smul.addr %s528, 8
        %s530 = scalar_lea.vmem %s12, %s529
        %p531 = scmp.lt.s32.totalorder %s28, 1
        %s532 = scalar_select %p531, %s28, 1
        %s533 = smul.addr %s532, 8
        %s534 = scalar_lea.vmem %s0, %s533
        %p535 = scmp.lt.s32.totalorder %s29, 1
        %s536 = scalar_select %p535, %s29, 1
        %s537 = smul.addr %s536, 4
        %s538 = smul.addr %s537, 4
        %s539 = scalar_lea.vmem %s1, %s538
        %p540 = scmp.lt.s32.totalorder %s29, 1
        %s541 = scalar_select %p540, %s29, 1
        %s542 = scalar_lea.vmem %s2, %s541
        %p543 = scmp.lt.s32.totalorder %s29, 1
        %s544 = scalar_select %p543, %s29, 1
        %s545 = smul.addr %s544, 4
        %s546 = smul.addr %s545, 4
        %s547 = scalar_lea.vmem %s3, %s546
        %p548 = scmp.lt.s32.totalorder %s29, 1
        %s549 = scalar_select %p548, %s29, 1
        %s550 = scalar_lea.vmem %s4, %s549
        %p551 = scmp.lt.s32.totalorder %s29, 1
        %s552 = scalar_select %p551, %s29, 1
        %s553 = smul.addr %s552, 4
        %s554 = smul.addr %s553, 4
        %s555 = scalar_lea.vmem %s5, %s554
        %p556 = scmp.lt.s32.totalorder %s29, 1
        %s557 = scalar_select %p556, %s29, 1
        %s558 = scalar_lea.vmem %s6, %s557
        %p559 = scmp.lt.s32.totalorder %s29, 1
        %s560 = scalar_select %p559, %s29, 1
        %s561 = smul.addr %s560, 8
        %s562 = smul.addr %s561, 4
        %s563 = scalar_lea.vmem %s7, %s562
        %p564 = scmp.lt.s32.totalorder %s29, 1
        %s565 = scalar_select %p564, %s29, 1
        %s566 = scalar_lea.vmem %s8, %s565
        %p567 = scmp.lt.s32.totalorder %s28, 1
        %s568 = scalar_select %p567, %s28, 1
        %s569 = smul.addr %s568, 8
        %s570 = scalar_lea.vmem %s12, %s569
        %p572 = scmp.eq.s32.totalorder %s29, 0
        // Predicated region
        $region73: #{sketch_model_forward.1} parent=67 // pred_check
          %p573 = pneg %p572
        $region74: #{sketch_model_forward.1} parent=67 // pred_check_branch
          %575 = sbr.rel (%p573) target = $region76
        $region75: #{sketch_model_forward.1} parent=67 // pred_region
          %v576 = vld [vmem:[%s534] sm:$0xff]
          %vm577 = vcmask 261120
          %578 = vst.msk [vmem:[#allocation2] sm:$0xff] %vm577, %v576
        $region76: #{sketch_model_forward.1} parent=67 // pred_fallthru
          _
        %v579 = vld [vmem:[#allocation2] sm:$0xff]
        %s580 = sld [smem:[#allocation3 + %s29]]
        %v581 = vlaneseq
        %v582 = vshrl.u32 %v581, 7
        %v583 = vlaneseq
        %v584 = vand.u32 %v583, 127
        %vm585 = vcmp.le.s32.totalorder %v584, %v582
        %v586 = vsel %vm585, 0.0, -1.7014117e+38
        %v587 = vpack.c.bf16 %v579, %v579
        %v588 = vld [vmem:[%s539] sm:$0xf]
        %v589 = vld [vmem:[%s539 + $0x4] sm:$0xf]
        %v590 = vld [vmem:[%s539 + $0x8] sm:$0xf]
        %v591 = vld [vmem:[%s539 + $0xc] sm:$0xf]
        %v592 = vld [vmem:[%s542] sm:$0x1]
        %v594 = vperm.slane %v592, 0
        %v600 = vunpack.c.l.b16 %v588
        %v601 = vunpack.c.l.b16 %v589
        %v602 = vunpack.c.l.b16 %v590
        %v603 = vunpack.c.l.b16 %v591
        %v604 = vpack.c.b16 %v601, %v600
        %v605 = vpack.c.b16 %v603, %v602
        %vm608 = vcmask 261120
        %v610 = vsel %vm608, %v587, 0
        %612 = vmatpush.bf16.msra.mxu0 0
        %613 = vmatpush.bf16.msra.mxu0 0
        %614 = vmatpush.bf16.msra.mxu0 0
        %615 = vmatpush.bf16.msra.mxu0 0
        %616 = vmatpush.bf16.msra.mxu0 0
        %617 = vmatpush.bf16.msra.mxu0 0
        %618 = vmatpush.bf16.msra.mxu0 %v605
        %619 = vmatpush.bf16.msra.mxu0 %v604
        %620 = vmatmul.bf16.gmra.mxu0 %v610
        %v621 = vpop.f32.mrf.mxu0
        %v622 = vadd.f32 %v594, %v621
        %v623 = vpop.f32.mrf.mxu0
        %624 = vdwg.mxu0
        %v625 = vpack.c.bf16 %v622, %v622
        %v627 = vunpack.c.l.b16 %v625
        %v628 = vpack.c.b16 %v627, %v627
        %629 = vrot.lane.b32.xlu0 %v628, 96
        %v630 = vpop.permute.xlu0 %629
        %vm631 = vcmask 130048
        %v633 = vsel %vm631, %v625, 0
        %v636 = vsel %vm631, %v630, 0
        %638 = vmatpush.bf16.xpose.msra.mxu0 0
        %639 = vmatpush.bf16.xpose.msra.mxu0 0
        %640 = vmatpush.bf16.xpose.msra.mxu0 0
        %641 = vmatpush.bf16.xpose.msra.mxu0 0
        %642 = vmatpush.bf16.xpose.msra.mxu0 0
        %643 = vmatpush.bf16.xpose.msra.mxu0 0
        %644 = vmatpush.bf16.xpose.msra.mxu0 0
        %645 = vmatpush.bf16.xpose.msra.mxu0 %v636
        %646 = vmatmul.bf16.gmra.mxu0 %v633
        %v647 = vpop.f32.mrf.mxu0
        %v648 = vadd.f32 %v586, %v647
        %v649 = vpop.f32.mrf.mxu0
        %650 = vdwg.mxu0
        %vm651 = vcmask 64512
        %v652 = vsel %vm651, %v648, -inf
        %653 = vmax.xlane.f32.xlu0 %v652
        %v654 = vpop.xlane.xlu0 %653
        %v655 = vsub.f32 %v648, %v654
        %v656 = vmul.f32 %v655, 1.442695
        %v657 = vpow.pop %v656
        %v658 = vsel %vm651, %v657, 0.0
        %659 = vadd.xlane.f32.xlu0 %v658
        %v660 = vpop.xlane.xlu0 %659
        %v661 = vrcp.pop %v660
        %v662 = vmul.f32 %v657, %v661
        %v663 = vpack.c.bf16 %v662, %v662
        %664 = vrot.lane.b32.xlu0 %v628, 64
        %v665 = vpop.permute.xlu0 %664
        %v667 = vsel %vm651, %v663, 0
        %vm669 = vcmask 1043456
        %v671 = vsel %vm669, %v665, 0
        %673 = vmatpush.bf16.msra.mxu0 0
        %674 = vmatpush.bf16.msra.mxu0 0
        %675 = vmatpush.bf16.msra.mxu0 0
        %676 = vmatpush.bf16.msra.mxu0 0
        %677 = vmatpush.bf16.msra.mxu0 0
        %678 = vmatpush.bf16.msra.mxu0 0
        %679 = vmatpush.bf16.msra.mxu0 0
        %680 = vmatpush.bf16.msra.mxu0 %v671
        %681 = vmatmul.bf16.gmra.mxu0 %v667
        %v682 = vpop.f32.mrf.mxu0
        %v683 = vadd.f32 0.0, %v682
        %v684 = vpop.f32.mrf.mxu0
        %685 = vdwg.mxu0
        %v686 = vpack.c.bf16 %v683, %v683
        %v687 = vld [vmem:[%s547] sm:$0xf]
        %v688 = vld [vmem:[%s547 + $0x4] sm:$0xf]
        %689 = vrot.lane.b32.xlu0 %v628, 112
        %v690 = vpop.permute.xlu0 %689
        %691 = vrot.lane.b32.xlu0 %v628, 80
        %v692 = vpop.permute.xlu0 %691
        %v694 = vsel %vm631, %v690, 0
        %v697 = vsel %vm631, %v692, 0
        %699 = vmatpush.bf16.xpose.msra.mxu0 0
        %700 = vmatpush.bf16.xpose.msra.mxu0 0
        %701 = vmatpush.bf16.xpose.msra.mxu0 0
        %702 = vmatpush.bf16.xpose.msra.mxu0 0
        %703 = vmatpush.bf16.xpose.msra.mxu0 0
        %704 = vmatpush.bf16.xpose.msra.mxu0 0
        %705 = vmatpush.bf16.xpose.msra.mxu0 0
        %706 = vmatpush.bf16.xpose.msra.mxu0 %v697
        %707 = vmatmul.bf16.gmra.mxu0 %v694
        %v708 = vpop.f32.mrf.mxu0
        %v709 = vadd.f32 %v586, %v708
        %v710 = vpop.f32.mrf.mxu0
        %711 = vdwg.mxu0
        %v712 = vsel %vm651, %v709, -inf
        %713 = vmax.xlane.f32.xlu0 %v712
        %v714 = vpop.xlane.xlu0 %713
        %v715 = vsub.f32 %v709, %v714
        %v716 = vmul.f32 %v715, 1.442695
        %v717 = vpow.pop %v716
        %v718 = vsel %vm651, %v717, 0.0
        %719 = vadd.xlane.f32.xlu0 %v718
        %v720 = vpop.xlane.xlu0 %719
        %v721 = vrcp.pop %v720
        %v722 = vmul.f32 %v717, %v721
        %v723 = vpack.c.bf16 %v722, %v722
        %724 = vrot.lane.b32.xlu0 %v628, 48
        %v725 = vpop.permute.xlu0 %724
        %v727 = vsel %vm651, %v723, 0
        %v730 = vsel %vm669, %v725, 0
        %732 = vmatpush.bf16.msra.mxu0 0
        %733 = vmatpush.bf16.msra.mxu0 0
        %734 = vmatpush.bf16.msra.mxu0 0
        %735 = vmatpush.bf16.msra.mxu0 0
        %736 = vmatpush.bf16.msra.mxu0 0
        %737 = vmatpush.bf16.msra.mxu0 0
        %738 = vmatpush.bf16.msra.mxu0 0
        %739 = vmatpush.bf16.msra.mxu0 %v730
        %740 = vmatmul.bf16.gmra.mxu0 %v727
        %v741 = vpop.f32.mrf.mxu0
        %v742 = vadd.f32 0.0, %v741
        %v743 = vpop.f32.mrf.mxu0
        %744 = vdwg.mxu0
        %v745 = vpack.c.bf16 %v742, %v742
        %v746 = vld [vmem:[%s547 + $0x8] sm:$0xf]
        %v747 = vld [vmem:[%s547 + $0xc] sm:$0xf]
        %v750 = vunpack.c.l.b16 %v746
        %v751 = vunpack.c.l.b16 %v747
        %v752 = vpack.c.b16 %v751, %v750
        %v755 = vsel %vm631, %v745, 0
        %757 = vmatpush.bf16.msra.mxu0 0
        %758 = vmatpush.bf16.msra.mxu0 0
        %759 = vmatpush.bf16.msra.mxu0 0
        %760 = vmatpush.bf16.msra.mxu0 0
        %761 = vmatpush.bf16.msra.mxu0 0
        %762 = vmatpush.bf16.msra.mxu0 0
        %763 = vmatpush.bf16.msra.mxu0 0
        %764 = vmatpush.bf16.msra.mxu0 %v752
        %765 = vmatmul.bf16.gmra.mxu0 %v755
        %v766 = vpop.f32.mrf.mxu0
        %v767 = vadd.f32 0.0, %v766
        %v768 = vpop.f32.mrf.mxu0
        %769 = vdwg.mxu0
        %v772 = vunpack.c.l.b16 %v687
        %v773 = vunpack.c.l.b16 %v688
        %v774 = vpack.c.b16 %v773, %v772
        %v777 = vsel %vm631, %v686, 0
        %779 = vmatpush.bf16.msra.mxu0 0
        %780 = vmatpush.bf16.msra.mxu0 0
        %781 = vmatpush.bf16.msra.mxu0 0
        %782 = vmatpush.bf16.msra.mxu0 0
        %783 = vmatpush.bf16.msra.mxu0 0
        %784 = vmatpush.bf16.msra.mxu0 0
        %785 = vmatpush.bf16.msra.mxu0 0
        %786 = vmatpush.bf16.msra.mxu0 %v774
        %787 = vmatmul.bf16.gmra.mxu0 %v777
        %v788 = vpop.f32.mrf.mxu0
        %v789 = vadd.f32 %v767, %v788
        %v790 = vpop.f32.mrf.mxu0
        %791 = vdwg.mxu0
        %v792 = vld [vmem:[%s550] sm:$0x1]
        %v794 = vperm.slane %v792, 0
        %v796 = vadd.f32 %v789, %v794
        %v797 = vstv %s580
        %v798 = vmul.f32 %v797, %v796
        %v799 = vadd.f32 %v579, %v798
        %v800 = vpack.c.bf16 %v799, %v799
        %v801 = vld [vmem:[%s555] sm:$0xf]
        %v802 = vld [vmem:[%s555 + $0x4] sm:$0xf]
        %v803 = vld [vmem:[%s555 + $0x8] sm:$0xf]
        %v804 = vld [vmem:[%s555 + $0xc] sm:$0xf]
        %v805 = vld [vmem:[%s558] sm:$0x1]
        %v807 = vperm.slane %v805, 0
        %v813 = vunpack.c.l.b16 %v801
        %v814 = vunpack.c.l.b16 %v802
        %v815 = vunpack.c.l.b16 %v803
        %v816 = vunpack.c.l.b16 %v804
        %v817 = vpack.c.b16 %v814, %v813
        %v818 = vpack.c.b16 %v816, %v815
        %v822 = vsel %vm608, %v800, 0
        %824 = vmatpush.bf16.msra.mxu0 0
        %825 = vmatpush.bf16.msra.mxu0 0
        %826 = vmatpush.bf16.msra.mxu0 0
        %827 = vmatpush.bf16.msra.mxu0 0
        %828 = vmatpush.bf16.msra.mxu0 0
        %829 = vmatpush.bf16.msra.mxu0 0
        %830 = vmatpush.bf16.msra.mxu0 %v818
        %831 = vmatpush.bf16.msra.mxu0 %v817
        %832 = vmatmul.bf16.gmra.mxu0 %v822
        %v833 = vpop.f32.mrf.mxu0
        %v834 = vadd.f32 %v807, %v833
        %v835 = vpop.f32.mrf.mxu0
        %836 = vdwg.mxu0
        %v837 = vmax.f32 %v834, 0.0
        %v838 = vpack.c.bf16 %v837, %v837
        %v839 = vld [vmem:[%s563] sm:$0xf]
        %v840 = vld [vmem:[%s563 + $0x4] sm:$0xf]
        %v841 = vld [vmem:[%s563 + $0x8] sm:$0xf]
        %v842 = vld [vmem:[%s563 + $0xc] sm:$0xf]
        %v843 = vld [vmem:[%s563 + $0x10] sm:$0xf]
        %v844 = vld [vmem:[%s563 + $0x14] sm:$0xf]
        %v845 = vld [vmem:[%s563 + $0x18] sm:$0xf]
        %v846 = vld [vmem:[%s563 + $0x1c] sm:$0xf]
        %v847 = vld [vmem:[%s566] sm:$0x1]
        %v849 = vperm.slane %v847, 0
        %v859 = vunpack.c.l.b16 %v839
        %v860 = vunpack.c.l.b16 %v840
        %v861 = vunpack.c.l.b16 %v841
        %v862 = vunpack.c.l.b16 %v842
        %v863 = vunpack.c.l.b16 %v843
        %v864 = vunpack.c.l.b16 %v844
        %v865 = vunpack.c.l.b16 %v845
        %v866 = vunpack.c.l.b16 %v846
        %v867 = vpack.c.b16 %v860, %v859
        %v868 = vpack.c.b16 %v862, %v861
        %v869 = vpack.c.b16 %v864, %v863
        %v870 = vpack.c.b16 %v866, %v865
        %vm875 = vcmask 523264
        %v877 = vsel %vm875, %v838, 0
        %879 = vmatpush.bf16.msra.mxu0 0
        %880 = vmatpush.bf16.msra.mxu0 0
        %881 = vmatpush.bf16.msra.mxu0 0
        %882 = vmatpush.bf16.msra.mxu0 0
        %883 = vmatpush.bf16.msra.mxu0 %v870
        %884 = vmatpush.bf16.msra.mxu0 %v869
        %885 = vmatpush.bf16.msra.mxu0 %v868
        %886 = vmatpush.bf16.msra.mxu0 %v867
        %887 = vmatmul.bf16.gmra.mxu0 %v877
        %v888 = vpop.f32.mrf.mxu0
        %v889 = vadd.f32 %v849, %v888
        %v890 = vpop.f32.mrf.mxu0
        %891 = vdwg.mxu0
        %v892 = vmul.f32 %v797, %v889
        %v893 = vadd.f32 %v799, %v892
        %894 = vst.msk [vmem:[#allocation2] sm:$0xff] %vm608, %v893
        %p895 = scmp.eq.s32.totalorder %s29, 1
        // Predicated region
        $region77: #{sketch_model_forward.1} parent=67 // pred_check
          %p896 = pneg %p895
        $region78: #{sketch_model_forward.1} parent=67 // pred_check_branch
          %898 = sbr.rel (%p896) target = $region80
        $region79: #{sketch_model_forward.1} parent=67 // pred_region
          %v899 = vpack.c.bf16 %v893, %v893
          %v900 = vld [vmem:[%s9] sm:$0xf]
          %v901 = vld [vmem:[%s9 + $0x4] sm:$0xf]
          %v902 = vld [vmem:[%s9 + $0x8] sm:$0xf]
          %v903 = vld [vmem:[%s9 + $0xc] sm:$0xf]
          %v904 = vld [vmem:[%s10] sm:$0x1]
          %v906 = vperm.slane %v904, 0
          %v912 = vunpack.c.l.b16 %v900
          %v913 = vunpack.c.l.b16 %v901
          %v914 = vunpack.c.l.b16 %v902
          %v915 = vunpack.c.l.b16 %v903
          %v916 = vpack.c.b16 %v913, %v912
          %v917 = vpack.c.b16 %v915, %v914
          %v921 = vsel %vm608, %v899, 0
          %923 = vmatpush.bf16.msra.mxu0 0
          %924 = vmatpush.bf16.msra.mxu0 0
          %925 = vmatpush.bf16.msra.mxu0 0
          %926 = vmatpush.bf16.msra.mxu0 0
          %927 = vmatpush.bf16.msra.mxu0 0
          %928 = vmatpush.bf16.msra.mxu0 0
          %929 = vmatpush.bf16.msra.mxu0 %v917
          %930 = vmatpush.bf16.msra.mxu0 %v916
          %931 = vmatmul.bf16.gmra.mxu0 %v921
          %v932 = vpop.f32.mrf.mxu0
          %v933 = vadd.f32 %v906, %v932
          %v934 = vpop.f32.mrf.mxu0
          %935 = vdwg.mxu0
          %936 = vst [vmem:[%s570] sm:$0xff] %v933
        $region80: #{sketch_model_forward.1} parent=67 // pred_fallthru
          _
        %p937 = scmp.lt.s32.totalorder %s28, 1
        %s938 = scalar_select %p937, %s28, 1
        %s939 = smul.addr %s938, 8
        %s940 = scalar_lea.vmem %s12, %s939
        // Predicated region
        $region81: #{sketch_model_forward.1} parent=67 // pred_check
          %p941 = pneg %p351
        $region82: #{sketch_model_forward.1} parent=67 // pred_check_branch
          %943 = sbr.rel (%p941) target = $region84
        $region83: #{sketch_model_forward.1} parent=67 // pred_region
          _
        $region84: #{sketch_model_forward.1} parent=67 // pred_fallthru
          _
      $region68: #{sketch_model_forward.1} parent=5 // pred_fallthru
        _
      %p944 = scmp.le.s32.totalorder 2, %s19
      // Predicated region
      $region85: #{sketch_model_forward.1} parent=5 // pred_check
        %p945 = pneg %p944
      $region86: #{sketch_model_forward.1} parent=5 // pred_check_branch
        %947 = sbr.rel (%p945) target = $region88
      $region87: #{sketch_model_forward.1} parent=5 // pred_region
        %s948 = ssub.s32 %s19, 2
        // Predicated region
        $region89: #{sketch_model_forward.1} parent=87 // pred_check
          %p949 = pneg %p357
        $region90: #{sketch_model_forward.1} parent=87 // pred_check_branch
          %951 = sbr.rel (%p949) target = $region92
        $region91: #{sketch_model_forward.1} parent=87 // pred_region
          %p952 = scmp.lt.s32.totalorder %s30, 1
          %s953 = scalar_select %p952, %s30, 1
          %s954 = smul.addr %s953, 8
          %s955 = scalar_lea.vmem %s12, %s954
        $region92: #{sketch_model_forward.1} parent=87 // pred_fallthru
          _
      $region88: #{sketch_model_forward.1} parent=5 // pred_fallthru
        _
    $region6: #{sketch_model_forward.1} parent=1 // loop_footer
      %s23 = sadd.s32 1, %s19
    $region7: #{sketch_model_forward.1} parent=1 // loop_footer_branch
      %18 = sbr.rel target = $region3
    $region8: #{sketch_model_forward.1} parent=1 // loop_exit
      _
    %956 = vsyncpa [#allocation4], 1
    %s957 = scalar_lea.sflag [#allocation4], 1
    %958 = vsyncpa %s957, 1

</llo_original>
